<compile_context>
chip_gen: v5e
topology: v5e:2x2
jax: 0.10.0
libtpu: 0.0.40
codegen_flags: <defaults>
</compile_context>

<pallas_src>
import functools

import jax
import jax.numpy as jnp
from jax import lax
from jax.experimental import pallas as pl
from jax.experimental.pallas import tpu as pltpu


def _round_up(a: int, b: int) -> int:
    return (a + b - 1) // b * b


def _linear_add_add_kernel(x_ref, w_ref, b_ref, y_ref, z_ref, o_ref, *scratch,
                           precision, nk):
    # x_ref: (tm, tk)   w_ref: (tk, tn)  (pre-transposed -> standard contraction)
    # b_ref: (1, tn)    y_ref / z_ref / o_ref: (tm, tn)
    # scratch: () when nk == 1, else (acc_ref,) with acc_ref: (tm, tn) f32.
    contrib = lax.dot_general(
        x_ref[...], w_ref[...],
        dimension_numbers=(((1,), (0,)), ((), ())),
        preferred_element_type=jnp.float32,
        precision=precision,
    )

    def epilogue(acc_f32):
        out = (acc_f32
               + b_ref[...].astype(jnp.float32)
               + y_ref[...].astype(jnp.float32)
               + z_ref[...].astype(jnp.float32))
        return out.astype(o_ref.dtype)

    if nk == 1:
        # Single K step: write the result directly, no accumulator round trip.
        o_ref[...] = epilogue(contrib)
    else:
        acc_ref = scratch[0]
        k = pl.program_id(2)

        @pl.when(k == 0)
        def _():
            acc_ref[...] = contrib          # no zero-init + add pass

        @pl.when(k > 0)
        def _():
            acc_ref[...] += contrib

        @pl.when(k == nk - 1)
        def _():
            o_ref[...] = epilogue(acc_ref[...])


def linear_add_add(x, weight, bias, y, z, *, tm=None, tn=None, tk=None,
                   precision=None):
    """out = x @ weight.T + bias + y + z, fused in one Pallas TPU kernel.

    x: (batch, seq, K); weight: (N, K) (nn.Linear layout); bias: (N,) or None;
    y, z: (batch, seq, N).
    """
    batch, seq, K = x.shape
    N = weight.shape[0]
    M = batch * seq

    itemsize = jnp.dtype(x.dtype).itemsize
    # Packed-sublane multiple for the row (second-minor) dim: 8 f32, 16 bf16,
    # 32 int8/fp8 -- avoids packed-layout shuffles for sub-32-bit dtypes.
    sub = max(8, 32 // max(itemsize, 1))

    # Default tiles: large (amortize per-step overhead, cut HBM re-streaming of
    # x and W), and 256-multiples on the lane dims for the v6e/v7x 256x256 MXU.
    if tm is None:
        tm = 512
    if tn is None:
        tn = 512
    if tk is None:
        tk = 512 if itemsize >= 4 else 1024

    # Never larger than the (padded) problem dims.
    tm = min(tm, _round_up(M, sub))
    tn = min(tn, _round_up(N, 128))
    tk = min(tk, _round_up(K, 128))
    # Rebalance for skinny shapes: if one output-tile dim is clamped small
    # (e.g. decode, M tiny), grow the other so the wide operand is streamed
    # fewer times. Still far inside every generation's VMEM budget.
    if tm <= 128:
        tn = min(1024, _round_up(N, 128))
    if tn <= 128:
        tm = min(1024, _round_up(M, sub))

    Mp, Np, Kp = _round_up(M, tm), _round_up(N, tn), _round_up(K, tk)
    grid = (Mp // tm, Np // tn, Kp // tk)
    nk = grid[2]

    # Only materialize padded HBM copies when actually needed.
    x2 = x.reshape(M, K)
    if (Mp, Kp) != (M, K):
        x2 = jnp.pad(x2, ((0, Mp - M), (0, Kp - K)))

    # One-time weight relayout to (K, N); for static inference weights, hoist
    # this transpose out of the hot path / pre-compute it once.
    wt = weight.T
    if (Kp, Np) != (K, N):
        wt = jnp.pad(wt, ((0, Kp - K), (0, Np - N)))

    b2 = bias if bias is not None else jnp.zeros((N,), dtype=x.dtype)
    if Np != N:
        b2 = jnp.pad(b2, (0, Np - N))
    b2 = b2.reshape(1, Np)

    y2 = y.reshape(M, N)
    z2 = z.reshape(M, N)
    if (Mp, Np) != (M, N):
        y2 = jnp.pad(y2, ((0, Mp - M), (0, Np - N)))
        z2 = jnp.pad(z2, ((0, Mp - M), (0, Np - N)))

    # Match PyTorch float32 nn.Linear numerics by default; packed dtypes use
    # the native MXU path (f32 accumulation either way).
    if precision is None:
        if (jnp.dtype(x.dtype) == jnp.float32
                and jnp.dtype(weight.dtype) == jnp.float32):
            precision = lax.Precision.HIGHEST
        else:
            precision = lax.Precision.DEFAULT

    scratch_shapes = []
    if nk > 1:
        scratch_shapes.append(pltpu.VMEM((tm, tn), jnp.float32))

    # VMEM budget: double-buffered inputs/outputs + f32 accumulator, with
    # headroom, capped at 40 MiB so it fits v7x's 64 MiB/TC. (On v5e/v6e the
    # cap could be raised toward 96 MiB to allow even larger tiles.)
    w_item = jnp.dtype(weight.dtype).itemsize
    yz_item = jnp.dtype(y.dtype).itemsize
    est = (2 * tm * tk * itemsize          # x (double-buffered)
           + 2 * tk * tn * w_item          # w
           + 2 * 2 * tm * tn * yz_item     # y, z
           + 2 * tm * tn * itemsize        # out
           + 2 * tn * 4)                   # bias
    if nk > 1:
        est += tm * tn * 4                 # accumulator
    vmem_limit = max(32 << 20, min(int(est * 2), 40 << 20))

    kernel = functools.partial(_linear_add_add_kernel,
                               precision=precision, nk=nk)

    out = pl.pallas_call(
        kernel,
        out_shape=jax.ShapeDtypeStruct((Mp, Np), x.dtype),
        grid_spec=pltpu.PrefetchScalarGridSpec(
            num_scalar_prefetch=0,
            grid=grid,
            in_specs=[
                pl.BlockSpec((tm, tk), lambda i, j, k: (i, k)),   # x tile
                pl.BlockSpec((tk, tn), lambda i, j, k: (k, j)),   # weight (K,N)
                pl.BlockSpec((1, tn),  lambda i, j, k: (0, j)),   # bias
                pl.BlockSpec((tm, tn), lambda i, j, k: (i, j)),   # y tile
                pl.BlockSpec((tm, tn), lambda i, j, k: (i, j)),   # z tile
            ],
            out_specs=pl.BlockSpec((tm, tn), lambda i, j, k: (i, j)),
            scratch_shapes=scratch_shapes,
        ),
        compiler_params=pltpu.CompilerParams(
            # On v7x, verify in the profile that the two "parallel" axes shard
            # across both TensorCores; switch M to pltpu.CORE_PARALLEL if not.
            dimension_semantics=("parallel", "parallel", "arbitrary"),
            vmem_limit_bytes=vmem_limit,
        ),
    )(x2, wt, b2, y2, z2)

    if (Mp, Np) != (M, N):
        out = out[:M, :N]
    return out.reshape(batch, seq, N)


if __name__ == "__main__":
    batch, seq, in_features, out_features = 2, 8, 32, 64

    key = jax.random.PRNGKey(0)
    kx, ky, kz, kw, kb = jax.random.split(key, 5)

    x = jax.random.normal(kx, (batch, seq, in_features), dtype=jnp.float32)
    y = jax.random.normal(ky, (batch, seq, out_features), dtype=jnp.float32)
    z = jax.random.normal(kz, (batch, seq, out_features), dtype=jnp.float32)

    # Deterministic "nn.Linear"-style parameters (synthetic, no checkpoint).
    bound = 1.0 / (in_features ** 0.5)
    weight = jax.random.uniform(kw, (out_features, in_features),
                                minval=-bound, maxval=bound, dtype=jnp.float32)
    bias = jax.random.uniform(kb, (out_features,),
                              minval=-bound, maxval=bound, dtype=jnp.float32)

    out = linear_add_add(x, weight, bias, y, z)
    out = jax.block_until_ready(out)

    # Pure-JAX reference check of the fused forward (f32, HIGHEST precision).
    ref = (jnp.einsum("bsk,nk->bsn", x, weight,
                      precision=lax.Precision.HIGHEST) + bias + y + z)
    assert out.shape == (batch, seq, out_features)
    assert jnp.allclose(out, ref, atol=1e-5, rtol=1e-5), "mismatch vs reference"

    print("KERNEL_OK")
</pallas_src>

<mosaic_0001>
module attributes {stable_mosaic.version = 11 : i64} {
  func.func @_linear_add_add_kernel(%arg0: i32, %arg1: i32, %arg2: i32, %arg3: memref<16x128xf32, #tpu.memory_space<vmem>>, %arg4: memref<128x128xf32, #tpu.memory_space<vmem>>, %arg5: memref<1x128xf32, #tpu.memory_space<vmem>>, %arg6: memref<16x128xf32, #tpu.memory_space<vmem>>, %arg7: memref<16x128xf32, #tpu.memory_space<vmem>>, %arg8: memref<16x128xf32, #tpu.memory_space<vmem>>) attributes {dimension_semantics = [#tpu.dimension_semantics<parallel>, #tpu.dimension_semantics<parallel>, #tpu.dimension_semantics<arbitrary>], iteration_bounds = array<i64: 1, 1, 1>, scalar_prefetch = 0 : i64, scratch_operands = 0 : i64, tpu.core_type = #tpu.core_type<tc>, window_params = [{transform_indices = @transform_0, window_bounds = array<i64: 16, 128>}, {transform_indices = @transform_1, window_bounds = array<i64: 128, 128>}, {transform_indices = @transform_2, window_bounds = array<i64: 1, 128>}, {transform_indices = @transform_3, window_bounds = array<i64: 16, 128>}, {transform_indices = @transform_4, window_bounds = array<i64: 16, 128>}, {transform_indices = @transform_5, window_bounds = array<i64: 16, 128>}]} {
    %c0 = arith.constant 0 : index
    %c0_0 = arith.constant 0 : index
    %0 = vector.load %arg3[%c0, %c0_0] : memref<16x128xf32, #tpu.memory_space<vmem>>, vector<16x128xf32>
    %c0_1 = arith.constant 0 : index
    %c0_2 = arith.constant 0 : index
    %1 = vector.load %arg4[%c0_1, %c0_2] : memref<128x128xf32, #tpu.memory_space<vmem>>, vector<128x128xf32>
    %cst = arith.constant dense<0.000000e+00> : vector<16x128xf32>
    %2 = tpu.matmul %0, %1, %cst {dimension_numbers = #tpu.dot_dimension_numbers<[1], [0], [0], [1], [0, 0, 1, 1], [], []>, precision = #tpu.contract_precision<fp32>} : vector<16x128xf32>, vector<128x128xf32>, vector<16x128xf32> -> vector<16x128xf32>
    %c0_3 = arith.constant 0 : index
    %c0_4 = arith.constant 0 : index
    %3 = vector.load %arg5[%c0_3, %c0_4] : memref<1x128xf32, #tpu.memory_space<vmem>>, vector<1x128xf32>
    %4 = vector.broadcast %3 : vector<1x128xf32> to vector<16x128xf32>
    %5 = arith.addf %2, %4 : vector<16x128xf32>
    %c0_5 = arith.constant 0 : index
    %c0_6 = arith.constant 0 : index
    %6 = vector.load %arg6[%c0_5, %c0_6] : memref<16x128xf32, #tpu.memory_space<vmem>>, vector<16x128xf32>
    %7 = arith.addf %5, %6 : vector<16x128xf32>
    %c0_7 = arith.constant 0 : index
    %c0_8 = arith.constant 0 : index
    %8 = vector.load %arg7[%c0_7, %c0_8] : memref<16x128xf32, #tpu.memory_space<vmem>>, vector<16x128xf32>
    %9 = arith.addf %7, %8 : vector<16x128xf32>
    %c0_9 = arith.constant 0 : index
    %c0_10 = arith.constant 0 : index
    %10 = vector.load %arg8[%c0_9, %c0_10] : memref<16x128xf32, #tpu.memory_space<vmem>>, vector<16x128xf32>
    tpu.vector_store %arg8[%c0_9, %c0_10], %9 {strides = array<i32>} : memref<16x128xf32, #tpu.memory_space<vmem>>, vector<16x128xf32>,
    return
  }
  func.func @transform_0(%arg0: i32, %arg1: i32, %arg2: i32) -> (i32, i32) {
    %c0_i32 = arith.constant 0 : i32
    return %arg0, %arg2 : i32, i32
  }
  func.func @transform_1(%arg0: i32, %arg1: i32, %arg2: i32) -> (i32, i32) {
    %c0_i32 = arith.constant 0 : i32
    return %arg2, %arg1 : i32, i32
  }
  func.func @transform_2(%arg0: i32, %arg1: i32, %arg2: i32) -> (i32, i32) {
    %c0_i32 = arith.constant 0 : i32
    %c0_i32_0 = arith.constant 0 : i32
    return %c0_i32, %arg1 : i32, i32
  }
  func.func @transform_3(%arg0: i32, %arg1: i32, %arg2: i32) -> (i32, i32) {
    %c0_i32 = arith.constant 0 : i32
    return %arg0, %arg1 : i32, i32
  }
  func.func @transform_4(%arg0: i32, %arg1: i32, %arg2: i32) -> (i32, i32) {
    %c0_i32 = arith.constant 0 : i32
    return %arg0, %arg1 : i32, i32
  }
  func.func @transform_5(%arg0: i32, %arg1: i32, %arg2: i32) -> (i32, i32) {
    %c0_i32 = arith.constant 0 : i32
    return %arg0, %arg1 : i32, i32
  }
}

</mosaic_0001>

<llo_original>
// kernel: tpu_custom_call.1
$region0: #{tpu_custom_call.1}
  #allocation0 [shape = 'u32[]', space=smem, size = 0x4, offset = 0x4, fixed_abs, tag = 'smem constant byte address 0x4 - core index']
  #allocation1 [shape = 'u32[72,128]{1,0:T(1,128)}', space=vmem, size = 0x9000, scoped, tag = 'internal scratch']
  %s0 = inlined_call_operand.hbm [shape: f32[16,128], index: 0, kind: input, shape index: {}]
  %s1 = inlined_call_operand.hbm [shape: f32[128,128], index: 1, kind: input, shape index: {}]
  %s2 = inlined_call_operand.vmem [shape: f32[1,128], index: 2, kind: input, shape index: {}]
  %s3 = inlined_call_operand.hbm [shape: f32[16,128], index: 3, kind: input, shape index: {}]
  %s4 = inlined_call_operand.hbm [shape: f32[16,128], index: 4, kind: input, shape index: {}]
  %s5 = inlined_call_operand.hbm [shape: f32[16,128], index: 5, kind: output, shape index: {}]
  %s6 = sld [smem:[#allocation0]]
  $region46: #{tpu_custom_call.1} parent=0
    _
  %s8 = ssub.s32 1, %s6
  %s9 = scalar_select 0, %s8, %s6
  $region1: #{tpu_custom_call.1} parent=0
    #allocation2 [shape = 'u8[8192]{0}', space=vmem, size = 0x2000, scoped, tag = 'input window, operand 0, single buffered']
    #allocation3 [shape = 's32[1]{0}', space=sflag, size = 0x4, scoped, tag = 'scoped memory for tpu_custom_call.1']
    #allocation4 [shape = 's32[1]{0}', space=sflag, size = 0x4, scoped, tag = 'scoped memory for tpu_custom_call.1']
    #allocation5 [shape = 'u8[65536]{0}', space=vmem, size = 0x10000, scoped, tag = 'input window, operand 1, single buffered']
    #allocation6 [shape = 's32[1]{0}', space=sflag, size = 0x4, scoped, tag = 'scoped memory for tpu_custom_call.1']
    #allocation7 [shape = 'u8[8192]{0}', space=vmem, size = 0x2000, scoped, tag = 'input window, operand 3, single buffered']
    #allocation8 [shape = 'u8[8192]{0}', space=vmem, size = 0x2000, scoped, tag = 'input window, operand 4, single buffered']
    #allocation9 [shape = 's32[1]{0}', space=sflag, size = 0x4, scoped, tag = 'scoped memory for tpu_custom_call.1']
    #allocation10 [shape = 'u8[8192]{0}', space=vmem, size = 0x2000, scoped, tag = 'output window, operand 0, single buffered']
    %10 = vsyncpa [#allocation3], 0
    %11 = vsyncpa [#allocation6], 0
    %12 = vsyncpa [#allocation9], 0
    %13 = vsyncpa [#allocation4], 0
    // Predicated region
    $region2: #{tpu_custom_call.1} parent=1 // pred_check
      _
    $region3: #{tpu_custom_call.1} parent=1 // pred_check_branch
      %15 = sbr.rel (0) target = $region5
    $region4: #{tpu_custom_call.1} parent=1 // pred_region
      %17 = vsyncadd [#allocation3], 0
      %s18 = sshll.u32 %s0, 4
      %s19 = int_to_ptr.hbm [resolvable:$true] %s18
      %s20 = sshll.u32 [#allocation2], 4
      %s21 = int_to_ptr.vmem [resolvable:$true] %s20
      %26 = dma.hbm_to_vmem [thread:$0]  %s19, 256, %s21, [#allocation3], 128, 128, 8
    $region5: #{tpu_custom_call.1} parent=1 // pred_fallthru
      _
    // Predicated region
    $region6: #{tpu_custom_call.1} parent=1 // pred_check
      _
    $region7: #{tpu_custom_call.1} parent=1 // pred_check_branch
      %28 = sbr.rel (0) target = $region9
    $region8: #{tpu_custom_call.1} parent=1 // pred_region
      %30 = vsyncadd [#allocation6], 0
      %s31 = sshll.u32 %s1, 4
      %s32 = int_to_ptr.hbm [resolvable:$true] %s31
      %s33 = sshll.u32 [#allocation5], 4
      %s34 = int_to_ptr.vmem [resolvable:$true] %s33
      %39 = dma.hbm_to_vmem [thread:$0]  %s32, 2048, %s34, [#allocation6], 128, 128, 8
    $region9: #{tpu_custom_call.1} parent=1 // pred_fallthru
      _
    // Predicated region
    $region10: #{tpu_custom_call.1} parent=1 // pred_check
      _
    $region11: #{tpu_custom_call.1} parent=1 // pred_check_branch
      %41 = sbr.rel (0) target = $region13
    $region12: #{tpu_custom_call.1} parent=1 // pred_region
      _
    $region13: #{tpu_custom_call.1} parent=1 // pred_fallthru
      _
    // Predicated region
    $region14: #{tpu_custom_call.1} parent=1 // pred_check
      _
    $region15: #{tpu_custom_call.1} parent=1 // pred_check_branch
      %43 = sbr.rel (0) target = $region17
    $region16: #{tpu_custom_call.1} parent=1 // pred_region
      %45 = vsyncadd [#allocation6], 0
      %s46 = sshll.u32 %s3, 4
      %s47 = int_to_ptr.hbm [resolvable:$true] %s46
      %s48 = sshll.u32 [#allocation7], 4
      %s49 = int_to_ptr.vmem [resolvable:$true] %s48
      %54 = dma.hbm_to_vmem [thread:$0]  %s47, 256, %s49, [#allocation6], 128, 128, 8
    $region17: #{tpu_custom_call.1} parent=1 // pred_fallthru
      _
    // Predicated region
    $region18: #{tpu_custom_call.1} parent=1 // pred_check
      _
    $region19: #{tpu_custom_call.1} parent=1 // pred_check_branch
      %56 = sbr.rel (0) target = $region21
    $region20: #{tpu_custom_call.1} parent=1 // pred_region
      %58 = vsyncadd [#allocation9], 0
      %s59 = sshll.u32 %s4, 4
      %s60 = int_to_ptr.hbm [resolvable:$true] %s59
      %s61 = sshll.u32 [#allocation8], 4
      %s62 = int_to_ptr.vmem [resolvable:$true] %s61
      %67 = dma.hbm_to_vmem [thread:$0]  %s60, 256, %s62, [#allocation9], 128, 128, 8
    $region21: #{tpu_custom_call.1} parent=1 // pred_fallthru
      _
    // Predicated region
    $region22: #{tpu_custom_call.1} parent=1 // pred_check
      _
    $region23: #{tpu_custom_call.1} parent=1 // pred_check_branch
      %69 = sbr.rel (0) target = $region25
    $region24: #{tpu_custom_call.1} parent=1 // pred_region
      %71 = dma.done [#allocation3], 256
    $region25: #{tpu_custom_call.1} parent=1 // pred_fallthru
      _
    // Predicated region
    $region26: #{tpu_custom_call.1} parent=1 // pred_check
      _
    $region27: #{tpu_custom_call.1} parent=1 // pred_check_branch
      %73 = sbr.rel (0) target = $region29
    $region28: #{tpu_custom_call.1} parent=1 // pred_region
      %75 = dma.done [#allocation6], 2048
    $region29: #{tpu_custom_call.1} parent=1 // pred_fallthru
      _
    // Predicated region
    $region30: #{tpu_custom_call.1} parent=1 // pred_check
      _
    $region31: #{tpu_custom_call.1} parent=1 // pred_check_branch
      %77 = sbr.rel (0) target = $region33
    $region32: #{tpu_custom_call.1} parent=1 // pred_region
      %79 = dma.done [#allocation6], 256
    $region33: #{tpu_custom_call.1} parent=1 // pred_fallthru
      _
    // Predicated region
    $region34: #{tpu_custom_call.1} parent=1 // pred_check
      _
    $region35: #{tpu_custom_call.1} parent=1 // pred_check_branch
      %81 = sbr.rel (0) target = $region37
    $region36: #{tpu_custom_call.1} parent=1 // pred_region
      %83 = dma.done [#allocation9], 256
    $region37: #{tpu_custom_call.1} parent=1 // pred_fallthru
      _
    %v84 = vld [vmem:[#allocation2] sm:$0xff]
    %v85 = vld [vmem:[#allocation2 + $0x8] sm:$0xff]
    %v86 = vld [vmem:[#allocation5] sm:$0xff]
    %v87 = vld [vmem:[#allocation5 + $0x8] sm:$0xff]
    %v88 = vld [vmem:[#allocation5 + $0x10] sm:$0xff]
    %v89 = vld [vmem:[#allocation5 + $0x18] sm:$0xff]
    %v90 = vld [vmem:[#allocation5 + $0x20] sm:$0xff]
    %v91 = vld [vmem:[#allocation5 + $0x28] sm:$0xff]
    %v92 = vld [vmem:[#allocation5 + $0x30] sm:$0xff]
    %v93 = vld [vmem:[#allocation5 + $0x38] sm:$0xff]
    %v94 = vld [vmem:[#allocation5 + $0x40] sm:$0xff]
    %v95 = vld [vmem:[#allocation5 + $0x48] sm:$0xff]
    %v96 = vld [vmem:[#allocation5 + $0x50] sm:$0xff]
    %v97 = vld [vmem:[#allocation5 + $0x58] sm:$0xff]
    %v98 = vld [vmem:[#allocation5 + $0x60] sm:$0xff]
    %v99 = vld [vmem:[#allocation5 + $0x68] sm:$0xff]
    %v100 = vld [vmem:[#allocation5 + $0x70] sm:$0xff]
    %v101 = vld [vmem:[#allocation5 + $0x78] sm:$0xff]
    %v102 = vld [vmem:[%s2] sm:$0x1]
    %v104 = vperm.slane %v102, 0
    %v106 = vand.u32 %v101, 4294901760
    %107 = vmatpush.msra.mxu0 %v106
    %v108 = vand.u32 %v100, 4294901760
    %109 = vmatpush.msra.mxu0 %v108
    %v110 = vand.u32 %v99, 4294901760
    %111 = vmatpush.msra.mxu0 %v110
    %v112 = vand.u32 %v98, 4294901760
    %113 = vmatpush.msra.mxu0 %v112
    %v114 = vand.u32 %v97, 4294901760
    %115 = vmatpush.msra.mxu0 %v114
    %v116 = vand.u32 %v96, 4294901760
    %117 = vmatpush.msra.mxu0 %v116
    %v118 = vand.u32 %v95, 4294901760
    %119 = vmatpush.msra.mxu0 %v118
    %v120 = vand.u32 %v94, 4294901760
    %121 = vmatpush.msra.mxu0 %v120
    %v122 = vand.u32 %v93, 4294901760
    %123 = vmatpush.msra.mxu0 %v122
    %v124 = vand.u32 %v92, 4294901760
    %125 = vmatpush.msra.mxu0 %v124
    %v126 = vand.u32 %v91, 4294901760
    %127 = vmatpush.msra.mxu0 %v126
    %v128 = vand.u32 %v90, 4294901760
    %129 = vmatpush.msra.mxu0 %v128
    %v130 = vand.u32 %v89, 4294901760
    %131 = vmatpush.msra.mxu0 %v130
    %v132 = vand.u32 %v88, 4294901760
    %133 = vmatpush.msra.mxu0 %v132
    %v134 = vand.u32 %v87, 4294901760
    %135 = vmatpush.msra.mxu0 %v134
    %v136 = vand.u32 %v86, 4294901760
    %137 = vmatpush.msra.mxu0 %v136
    %v138 = vand.u32 %v84, 4294901760
    %v139 = vsub.f32 %v84, %v138
    %v140 = vand.u32 %v139, 4294901760
    %v141 = vsub.f32 %v139, %v140
    %v142 = vand.u32 %v141, 4294901760
    %143 = vmatmul.f32.gmra.mxu0 %v142
    %v144 = vpop.f32.mrf.mxu0
    %v145 = vadd.f32 %v104, %v144
    %v146 = vand.u32 %v85, 4294901760
    %v147 = vsub.f32 %v85, %v146
    %v148 = vand.u32 %v147, 4294901760
    %v149 = vsub.f32 %v147, %v148
    %v150 = vand.u32 %v149, 4294901760
    %151 = vmatmul.f32.gmra.mxu0 %v150
    %v152 = vpop.f32.mrf.mxu0
    %v153 = vadd.f32 %v104, %v152
    %154 = vdwg.mxu0
    %v155 = vand.u32 %v101, 4294901760
    %v156 = vsub.f32 %v101, %v155
    %v157 = vand.u32 %v156, 4294901760
    %v158 = vsub.f32 %v156, %v157
    %v159 = vand.u32 %v158, 4294901760
    %160 = vmatpush.msra.mxu0 %v159
    %v161 = vand.u32 %v100, 4294901760
    %v162 = vsub.f32 %v100, %v161
    %v163 = vand.u32 %v162, 4294901760
    %v164 = vsub.f32 %v162, %v163
    %v165 = vand.u32 %v164, 4294901760
    %166 = vmatpush.msra.mxu0 %v165
    %v167 = vand.u32 %v99, 4294901760
    %v168 = vsub.f32 %v99, %v167
    %v169 = vand.u32 %v168, 4294901760
    %v170 = vsub.f32 %v168, %v169
    %v171 = vand.u32 %v170, 4294901760
    %172 = vmatpush.msra.mxu0 %v171
    %v173 = vand.u32 %v98, 4294901760
    %v174 = vsub.f32 %v98, %v173
    %v175 = vand.u32 %v174, 4294901760
    %v176 = vsub.f32 %v174, %v175
    %v177 = vand.u32 %v176, 4294901760
    %178 = vmatpush.msra.mxu0 %v177
    %v179 = vand.u32 %v97, 4294901760
    %v180 = vsub.f32 %v97, %v179
    %v181 = vand.u32 %v180, 4294901760
    %v182 = vsub.f32 %v180, %v181
    %v183 = vand.u32 %v182, 4294901760
    %184 = vmatpush.msra.mxu0 %v183
    %v185 = vand.u32 %v96, 4294901760
    %v186 = vsub.f32 %v96, %v185
    %v187 = vand.u32 %v186, 4294901760
    %v188 = vsub.f32 %v186, %v187
    %v189 = vand.u32 %v188, 4294901760
    %190 = vmatpush.msra.mxu0 %v189
    %v191 = vand.u32 %v95, 4294901760
    %v192 = vsub.f32 %v95, %v191
    %v193 = vand.u32 %v192, 4294901760
    %v194 = vsub.f32 %v192, %v193
    %v195 = vand.u32 %v194, 4294901760
    %196 = vmatpush.msra.mxu0 %v195
    %v197 = vand.u32 %v94, 4294901760
    %v198 = vsub.f32 %v94, %v197
    %v199 = vand.u32 %v198, 4294901760
    %v200 = vsub.f32 %v198, %v199
    %v201 = vand.u32 %v200, 4294901760
    %202 = vmatpush.msra.mxu0 %v201
    %v203 = vand.u32 %v93, 4294901760
    %v204 = vsub.f32 %v93, %v203
    %v205 = vand.u32 %v204, 4294901760
    %v206 = vsub.f32 %v204, %v205
    %v207 = vand.u32 %v206, 4294901760
    %208 = vmatpush.msra.mxu0 %v207
    %v209 = vand.u32 %v92, 4294901760
    %v210 = vsub.f32 %v92, %v209
    %v211 = vand.u32 %v210, 4294901760
    %v212 = vsub.f32 %v210, %v211
    %v213 = vand.u32 %v212, 4294901760
    %214 = vmatpush.msra.mxu0 %v213
    %v215 = vand.u32 %v91, 4294901760
    %v216 = vsub.f32 %v91, %v215
    %v217 = vand.u32 %v216, 4294901760
    %v218 = vsub.f32 %v216, %v217
    %v219 = vand.u32 %v218, 4294901760
    %220 = vmatpush.msra.mxu0 %v219
    %v221 = vand.u32 %v90, 4294901760
    %v222 = vsub.f32 %v90, %v221
    %v223 = vand.u32 %v222, 4294901760
    %v224 = vsub.f32 %v222, %v223
    %v225 = vand.u32 %v224, 4294901760
    %226 = vmatpush.msra.mxu0 %v225
    %v227 = vand.u32 %v89, 4294901760
    %v228 = vsub.f32 %v89, %v227
    %v229 = vand.u32 %v228, 4294901760
    %v230 = vsub.f32 %v228, %v229
    %v231 = vand.u32 %v230, 4294901760
    %232 = vmatpush.msra.mxu0 %v231
    %v233 = vand.u32 %v88, 4294901760
    %v234 = vsub.f32 %v88, %v233
    %v235 = vand.u32 %v234, 4294901760
    %v236 = vsub.f32 %v234, %v235
    %v237 = vand.u32 %v236, 4294901760
    %238 = vmatpush.msra.mxu0 %v237
    %v239 = vand.u32 %v87, 4294901760
    %v240 = vsub.f32 %v87, %v239
    %v241 = vand.u32 %v240, 4294901760
    %v242 = vsub.f32 %v240, %v241
    %v243 = vand.u32 %v242, 4294901760
    %244 = vmatpush.msra.mxu0 %v243
    %v245 = vand.u32 %v86, 4294901760
    %v246 = vsub.f32 %v86, %v245
    %v247 = vand.u32 %v246, 4294901760
    %v248 = vsub.f32 %v246, %v247
    %v249 = vand.u32 %v248, 4294901760
    %250 = vmatpush.msra.mxu0 %v249
    %v251 = vand.u32 %v84, 4294901760
    %252 = vmatmul.f32.gmra.mxu0 %v251
    %v253 = vpop.f32.mrf.mxu0
    %v254 = vadd.f32 %v145, %v253
    %v255 = vand.u32 %v85, 4294901760
    %256 = vmatmul.f32.gmra.mxu0 %v255
    %v257 = vpop.f32.mrf.mxu0
    %v258 = vadd.f32 %v153, %v257
    %259 = vdwg.mxu0
    %v260 = vand.u32 %v101, 4294901760
    %v261 = vsub.f32 %v101, %v260
    %262 = vmatpush.msra.mxu0 %v261
    %v263 = vand.u32 %v100, 4294901760
    %v264 = vsub.f32 %v100, %v263
    %265 = vmatpush.msra.mxu0 %v264
    %v266 = vand.u32 %v99, 4294901760
    %v267 = vsub.f32 %v99, %v266
    %268 = vmatpush.msra.mxu0 %v267
    %v269 = vand.u32 %v98, 4294901760
    %v270 = vsub.f32 %v98, %v269
    %271 = vmatpush.msra.mxu0 %v270
    %v272 = vand.u32 %v97, 4294901760
    %v273 = vsub.f32 %v97, %v272
    %274 = vmatpush.msra.mxu0 %v273
    %v275 = vand.u32 %v96, 4294901760
    %v276 = vsub.f32 %v96, %v275
    %277 = vmatpush.msra.mxu0 %v276
    %v278 = vand.u32 %v95, 4294901760
    %v279 = vsub.f32 %v95, %v278
    %280 = vmatpush.msra.mxu0 %v279
    %v281 = vand.u32 %v94, 4294901760
    %v282 = vsub.f32 %v94, %v281
    %283 = vmatpush.msra.mxu0 %v282
    %v284 = vand.u32 %v93, 4294901760
    %v285 = vsub.f32 %v93, %v284
    %286 = vmatpush.msra.mxu0 %v285
    %v287 = vand.u32 %v92, 4294901760
    %v288 = vsub.f32 %v92, %v287
    %289 = vmatpush.msra.mxu0 %v288
    %v290 = vand.u32 %v91, 4294901760
    %v291 = vsub.f32 %v91, %v290
    %292 = vmatpush.msra.mxu0 %v291
    %v293 = vand.u32 %v90, 4294901760
    %v294 = vsub.f32 %v90, %v293
    %295 = vmatpush.msra.mxu0 %v294
    %v296 = vand.u32 %v89, 4294901760
    %v297 = vsub.f32 %v89, %v296
    %298 = vmatpush.msra.mxu0 %v297
    %v299 = vand.u32 %v88, 4294901760
    %v300 = vsub.f32 %v88, %v299
    %301 = vmatpush.msra.mxu0 %v300
    %v302 = vand.u32 %v87, 4294901760
    %v303 = vsub.f32 %v87, %v302
    %304 = vmatpush.msra.mxu0 %v303
    %v305 = vand.u32 %v86, 4294901760
    %v306 = vsub.f32 %v86, %v305
    %307 = vmatpush.msra.mxu0 %v306
    %v308 = vand.u32 %v84, 4294901760
    %v309 = vsub.f32 %v84, %v308
    %310 = vmatmul.f32.gmra.mxu0 %v309
    %v311 = vpop.f32.mrf.mxu0
    %v312 = vadd.f32 %v254, %v311
    %v313 = vand.u32 %v85, 4294901760
    %v314 = vsub.f32 %v85, %v313
    %315 = vmatmul.f32.gmra.mxu0 %v314
    %v316 = vpop.f32.mrf.mxu0
    %v317 = vadd.f32 %v258, %v316
    %318 = vdwg.mxu0
    %v319 = vand.u32 %v101, 4294901760
    %320 = vmatpush.msra.mxu0 %v319
    %v321 = vand.u32 %v100, 4294901760
    %322 = vmatpush.msra.mxu0 %v321
    %v323 = vand.u32 %v99, 4294901760
    %324 = vmatpush.msra.mxu0 %v323
    %v325 = vand.u32 %v98, 4294901760
    %326 = vmatpush.msra.mxu0 %v325
    %v327 = vand.u32 %v97, 4294901760
    %328 = vmatpush.msra.mxu0 %v327
    %v329 = vand.u32 %v96, 4294901760
    %330 = vmatpush.msra.mxu0 %v329
    %v331 = vand.u32 %v95, 4294901760
    %332 = vmatpush.msra.mxu0 %v331
    %v333 = vand.u32 %v94, 4294901760
    %334 = vmatpush.msra.mxu0 %v333
    %v335 = vand.u32 %v93, 4294901760
    %336 = vmatpush.msra.mxu0 %v335
    %v337 = vand.u32 %v92, 4294901760
    %338 = vmatpush.msra.mxu0 %v337
    %v339 = vand.u32 %v91, 4294901760
    %340 = vmatpush.msra.mxu0 %v339
    %v341 = vand.u32 %v90, 4294901760
    %342 = vmatpush.msra.mxu0 %v341
    %v343 = vand.u32 %v89, 4294901760
    %344 = vmatpush.msra.mxu0 %v343
    %v345 = vand.u32 %v88, 4294901760
    %346 = vmatpush.msra.mxu0 %v345
    %v347 = vand.u32 %v87, 4294901760
    %348 = vmatpush.msra.mxu0 %v347
    %v349 = vand.u32 %v86, 4294901760
    %350 = vmatpush.msra.mxu0 %v349
    %v351 = vand.u32 %v84, 4294901760
    %v352 = vsub.f32 %v84, %v351
    %v353 = vand.u32 %v352, 4294901760
    %354 = vmatmul.f32.gmra.mxu0 %v353
    %v355 = vpop.f32.mrf.mxu0
    %v356 = vadd.f32 %v312, %v355
    %v357 = vand.u32 %v85, 4294901760
    %v358 = vsub.f32 %v85, %v357
    %v359 = vand.u32 %v358, 4294901760
    %360 = vmatmul.f32.gmra.mxu0 %v359
    %v361 = vpop.f32.mrf.mxu0
    %v362 = vadd.f32 %v317, %v361
    %363 = vdwg.mxu0
    %v364 = vand.u32 %v101, 4294901760
    %v365 = vsub.f32 %v101, %v364
    %v366 = vand.u32 %v365, 4294901760
    %367 = vmatpush.msra.mxu0 %v366
    %v368 = vand.u32 %v100, 4294901760
    %v369 = vsub.f32 %v100, %v368
    %v370 = vand.u32 %v369, 4294901760
    %371 = vmatpush.msra.mxu0 %v370
    %v372 = vand.u32 %v99, 4294901760
    %v373 = vsub.f32 %v99, %v372
    %v374 = vand.u32 %v373, 4294901760
    %375 = vmatpush.msra.mxu0 %v374
    %v376 = vand.u32 %v98, 4294901760
    %v377 = vsub.f32 %v98, %v376
    %v378 = vand.u32 %v377, 4294901760
    %379 = vmatpush.msra.mxu0 %v378
    %v380 = vand.u32 %v97, 4294901760
    %v381 = vsub.f32 %v97, %v380
    %v382 = vand.u32 %v381, 4294901760
    %383 = vmatpush.msra.mxu0 %v382
    %v384 = vand.u32 %v96, 4294901760
    %v385 = vsub.f32 %v96, %v384
    %v386 = vand.u32 %v385, 4294901760
    %387 = vmatpush.msra.mxu0 %v386
    %v388 = vand.u32 %v95, 4294901760
    %v389 = vsub.f32 %v95, %v388
    %v390 = vand.u32 %v389, 4294901760
    %391 = vmatpush.msra.mxu0 %v390
    %v392 = vand.u32 %v94, 4294901760
    %v393 = vsub.f32 %v94, %v392
    %v394 = vand.u32 %v393, 4294901760
    %395 = vmatpush.msra.mxu0 %v394
    %v396 = vand.u32 %v93, 4294901760
    %v397 = vsub.f32 %v93, %v396
    %v398 = vand.u32 %v397, 4294901760
    %399 = vmatpush.msra.mxu0 %v398
    %v400 = vand.u32 %v92, 4294901760
    %v401 = vsub.f32 %v92, %v400
    %v402 = vand.u32 %v401, 4294901760
    %403 = vmatpush.msra.mxu0 %v402
    %v404 = vand.u32 %v91, 4294901760
    %v405 = vsub.f32 %v91, %v404
    %v406 = vand.u32 %v405, 4294901760
    %407 = vmatpush.msra.mxu0 %v406
    %v408 = vand.u32 %v90, 4294901760
    %v409 = vsub.f32 %v90, %v408
    %v410 = vand.u32 %v409, 4294901760
    %411 = vmatpush.msra.mxu0 %v410
    %v412 = vand.u32 %v89, 4294901760
    %v413 = vsub.f32 %v89, %v412
    %v414 = vand.u32 %v413, 4294901760
    %415 = vmatpush.msra.mxu0 %v414
    %v416 = vand.u32 %v88, 4294901760
    %v417 = vsub.f32 %v88, %v416
    %v418 = vand.u32 %v417, 4294901760
    %419 = vmatpush.msra.mxu0 %v418
    %v420 = vand.u32 %v87, 4294901760
    %v421 = vsub.f32 %v87, %v420
    %v422 = vand.u32 %v421, 4294901760
    %423 = vmatpush.msra.mxu0 %v422
    %v424 = vand.u32 %v86, 4294901760
    %v425 = vsub.f32 %v86, %v424
    %v426 = vand.u32 %v425, 4294901760
    %427 = vmatpush.msra.mxu0 %v426
    %v428 = vand.u32 %v84, 4294901760
    %429 = vmatmul.f32.gmra.mxu0 %v428
    %v430 = vpop.f32.mrf.mxu0
    %v431 = vadd.f32 %v356, %v430
    %v432 = vand.u32 %v85, 4294901760
    %433 = vmatmul.f32.gmra.mxu0 %v432
    %v434 = vpop.f32.mrf.mxu0
    %v435 = vadd.f32 %v362, %v434
    %436 = vdwg.mxu0
    %v437 = vand.u32 %v101, 4294901760
    %438 = vmatpush.msra.mxu0 %v437
    %v439 = vand.u32 %v100, 4294901760
    %440 = vmatpush.msra.mxu0 %v439
    %v441 = vand.u32 %v99, 4294901760
    %442 = vmatpush.msra.mxu0 %v441
    %v443 = vand.u32 %v98, 4294901760
    %444 = vmatpush.msra.mxu0 %v443
    %v445 = vand.u32 %v97, 4294901760
    %446 = vmatpush.msra.mxu0 %v445
    %v447 = vand.u32 %v96, 4294901760
    %448 = vmatpush.msra.mxu0 %v447
    %v449 = vand.u32 %v95, 4294901760
    %450 = vmatpush.msra.mxu0 %v449
    %v451 = vand.u32 %v94, 4294901760
    %452 = vmatpush.msra.mxu0 %v451
    %v453 = vand.u32 %v93, 4294901760
    %454 = vmatpush.msra.mxu0 %v453
    %v455 = vand.u32 %v92, 4294901760
    %456 = vmatpush.msra.mxu0 %v455
    %v457 = vand.u32 %v91, 4294901760
    %458 = vmatpush.msra.mxu0 %v457
    %v459 = vand.u32 %v90, 4294901760
    %460 = vmatpush.msra.mxu0 %v459
    %v461 = vand.u32 %v89, 4294901760
    %462 = vmatpush.msra.mxu0 %v461
    %v463 = vand.u32 %v88, 4294901760
    %464 = vmatpush.msra.mxu0 %v463
    %v465 = vand.u32 %v87, 4294901760
    %466 = vmatpush.msra.mxu0 %v465
    %v467 = vand.u32 %v86, 4294901760
    %468 = vmatpush.msra.mxu0 %v467
    %v469 = vand.u32 %v84, 4294901760
    %470 = vmatmul.f32.gmra.mxu0 %v469
    %v471 = vpop.f32.mrf.mxu0
    %v472 = vadd.f32 %v431, %v471
    %v473 = vand.u32 %v85, 4294901760
    %474 = vmatmul.f32.gmra.mxu0 %v473
    %v475 = vpop.f32.mrf.mxu0
    %v476 = vadd.f32 %v435, %v475
    %477 = vdwg.mxu0
    %v478 = vld [vmem:[#allocation7] sm:$0xff]
    %v479 = vld [vmem:[#allocation7 + $0x8] sm:$0xff]
    %v480 = vadd.f32 %v472, %v478
    %v481 = vadd.f32 %v476, %v479
    %v482 = vld [vmem:[#allocation8] sm:$0xff]
    %v483 = vld [vmem:[#allocation8 + $0x8] sm:$0xff]
    %v484 = vadd.f32 %v480, %v482
    %v485 = vadd.f32 %v481, %v483
    %486 = vst [vmem:[#allocation10] sm:$0xff] %v484
    %487 = vst [vmem:[#allocation10 + $0x8] sm:$0xff] %v485
    // Predicated region
    $region38: #{tpu_custom_call.1} parent=1 // pred_check
      _
    $region39: #{tpu_custom_call.1} parent=1 // pred_check_branch
      %489 = sbr.rel (0) target = $region41
    $region40: #{tpu_custom_call.1} parent=1 // pred_region
      %491 = vsyncadd [#allocation4], 0
      %s492 = sshll.u32 [#allocation10], 4
      %s493 = int_to_ptr.vmem [resolvable:$true] %s492
      %s494 = sshll.u32 %s5, 4
      %s495 = int_to_ptr.hbm [resolvable:$true] %s494
      %500 = dma.vmem_to_hbm [thread:$0]  %s493, 256, %s495, [#allocation4], 128, 128, 8
    $region41: #{tpu_custom_call.1} parent=1 // pred_fallthru
      _
    // Predicated region
    $region42: #{tpu_custom_call.1} parent=1 // pred_check
      _
    $region43: #{tpu_custom_call.1} parent=1 // pred_check_branch
      %502 = sbr.rel (0) target = $region45
    $region44: #{tpu_custom_call.1} parent=1 // pred_region
      %504 = dma.done [#allocation4], 256
    $region45: #{tpu_custom_call.1} parent=1 // pred_fallthru
      _
    %505 = vsyncpa [#allocation3], 1
    %506 = vsyncpa [#allocation6], 1
    %507 = vsyncpa [#allocation9], 1
    %508 = vsyncpa [#allocation4], 1

</llo_original>
